<compile_context>
chip_gen: v7x
topology: tpu7x:2x2x1
jax: 0.10.0
libtpu: 0.0.40
codegen_flags: <defaults>
</compile_context>

<pallas_src>
import math
import numpy as np
import jax
import jax.numpy as jnp
from jax.experimental import pallas as pl
from jax.experimental.pallas import tpu as pltpu


def _round_up(x, m):
    return (x + m - 1) // m * m


def _sobol_1d(n):
    """First Sobol dimension in Gray-code order (matches torch SobolEngine dim 0)."""
    nbits = 30
    seq = np.zeros(n, dtype=np.float64)
    cur = 0
    for i in range(1, n):
        c = (i & -i).bit_length() - 1
        cur ^= 1 << (nbits - 1 - c)
        seq[i] = cur / float(1 << nbits)
    return seq


def _pc_acc_kernel(x_ref, w_ref, t_ref, o_ref):
    # x: (TM, Kp) bf16 input bits; w: (Kp, TO) bf16 weight bits (K-pad rows are 0)
    # t: (1, TO) f32 folded threshold = scale_add - bias_bit - K + colsum(W)
    x = x_ref[...]
    # single MXU pass, f32 accumulation (exact for 0/1 bits)
    dot = jnp.dot(x, w_ref[...], preferred_element_type=jnp.float32)
    # cheap XLU reduce replaces the second (complement-path) matmul
    rowsum = jnp.sum(x.astype(jnp.float32), axis=-1, keepdims=True)
    lhs = 2.0 * dot - rowsum
    o_ref[...] = jnp.where(lhs >= t_ref[...], 1.0, 0.0).astype(o_ref.dtype)


def fsu_conv2d_forward(x, weight_ext, bias_ext, *, stride=1, padding=0, dilation=1,
                       width=8, mode="bipolar"):
    """x: (N, C, H, W) NCHW unary input bits (float 0/1). Returns (N, O, OH, OW) float32."""
    assert mode == "bipolar"
    N, C, H, W = x.shape
    O, Cw, KH, KW = weight_ext.shape
    assert C == Cw
    p, s, d = padding, stride, dilation
    OH = (H + 2 * p - d * (KH - 1) - 1) // s + 1
    OW = (W + 2 * p - d * (KW - 1) - 1) // s + 1
    K = C * KH * KW
    M = N * OH * OW
    scale_add = float(K + 1)  # kernel_size * in_channels + bias(True)

    # ---- glue: bit generation (BinGen + Sobol RNG + BSGen at read-index 0) ----
    rng = jnp.asarray(_sobol_1d(2 ** width) * (2 ** width), jnp.float32)
    wq = jnp.round((weight_ext + 1.0) / 2.0 * (2 ** width))          # BinGen (bipolar)
    wbit1 = (wq.reshape(O, K) > rng[0]).astype(jnp.float32)          # BSGen, wrdx = 0
    bq = jnp.round((bias_ext + 1.0) / 2.0 * (2 ** width))
    bbit = (bq > rng[0]).astype(jnp.float32)                         # (O,)

    # ---- fold bias / constant K / colsum(W) / FSUAdd threshold into one O-vector ----
    colsum_w = jnp.sum(wbit1, axis=1)                                # (O,)
    thr = scale_add - bbit - float(K) + colsum_w                     # (O,) exact integers

    # ---- glue: even-cycle zero padding + im2col emitted directly in (M, K) order ----
    # Only the small NCHW->NHWC transpose is materialized; the 9x patch matrix is built
    # in bf16 and already in the (M, K) layout the kernel consumes.
    xb = x.astype(jnp.bfloat16).transpose(0, 2, 3, 1)                # (N, H, W, C)
    xp = jnp.pad(xb, ((0, 0), (p, p), (p, p), (0, 0)))
    cols = []
    for i in range(KH):
        for j in range(KW):
            h0, w0 = i * d, j * d
            cols.append(xp[:, h0:h0 + (OH - 1) * s + 1:s,
                            w0:w0 + (OW - 1) * s + 1:s, :])          # (N, OH, OW, C)
    # stack last => (N, OH, OW, C, KH*KW); flatten => K ordered (c, kh, kw) like unfold
    X = jnp.stack(cols, axis=-1).reshape(M, K)

    # ---- TPU tiling (zero K-padding: contributes 0 to dot, rowsum and colsum) ----
    TM = min(512, _round_up(M, 256))
    TO = min(512, _round_up(O, 128))
    Mp = _round_up(M, TM)
    Op = _round_up(O, TO)
    Kp = _round_up(K, 128)
    Xp = jnp.pad(X, ((0, Mp - M), (0, Kp - K)))
    Wp = jnp.zeros((Kp, Op), jnp.bfloat16).at[:K, :O].set(wbit1.T.astype(jnp.bfloat16))
    Tp = jnp.full((1, Op), 1e9, jnp.float32).at[0, :O].set(thr)      # padded O cols -> 0

    out = pl.pallas_call(
        _pc_acc_kernel,
        out_shape=jax.ShapeDtypeStruct((Mp, Op), jnp.bfloat16),      # 0/1 exact in bf16
        grid_spec=pltpu.PrefetchScalarGridSpec(
            num_scalar_prefetch=0,
            grid=(Mp // TM, Op // TO),
            in_specs=[pl.BlockSpec((TM, Kp), lambda i, j: (i, 0)),
                      pl.BlockSpec((Kp, TO), lambda i, j: (0, j)),
                      pl.BlockSpec((1, TO), lambda i, j: (0, j))],
            out_specs=pl.BlockSpec((TM, TO), lambda i, j: (i, j)),
        ),
        compiler_params=pltpu.CompilerParams(
            dimension_semantics=("parallel", "parallel"),
            vmem_limit_bytes=64 * 1024 * 1024),
    )(Xp, Wp, Tp)

    # back to PyTorch NCHW float32 (single fused slice/cast/transpose pass)
    y = out[:M, :O].astype(jnp.float32).reshape(N, OH, OW, O).transpose(0, 3, 1, 2)
    return y


def _reference(x, weight_ext, bias_ext, *, stride=1, padding=0, dilation=1, width=8):
    """Plain-JAX f32 reference of the same first-cycle semantics (two-matmul form)."""
    N, C, H, W = x.shape
    O, _, KH, KW = weight_ext.shape
    p, s, d = padding, stride, dilation
    OH = (H + 2 * p - d * (KH - 1) - 1) // s + 1
    OW = (W + 2 * p - d * (KW - 1) - 1) // s + 1
    K = C * KH * KW
    rng0 = 0.0
    wbit1 = (jnp.round((weight_ext + 1.0) / 2.0 * (2 ** width)).reshape(O, K) > rng0
             ).astype(jnp.float32)
    bbit = (jnp.round((bias_ext + 1.0) / 2.0 * (2 ** width)) > rng0).astype(jnp.float32)
    xp = jnp.pad(x.astype(jnp.float32), ((0, 0), (0, 0), (p, p), (p, p)))
    cols = []
    for i in range(KH):
        for j in range(KW):
            h0, w0 = i * d, j * d
            cols.append(xp[:, :, h0:h0 + (OH - 1) * s + 1:s, w0:w0 + (OW - 1) * s + 1:s])
    X = jnp.stack(cols, axis=2).reshape(N, K, OH * OW).transpose(0, 2, 1).reshape(-1, K)
    pc = X @ wbit1.T + bbit[None, :] + (1.0 - X) @ (1.0 - wbit1).T
    y = (pc >= float(K + 1)).astype(jnp.float32)
    return y.reshape(N, OH, OW, O).transpose(0, 3, 1, 2)


if __name__ == "__main__":
    key = jax.random.PRNGKey(0)
    k1, k2, k3 = jax.random.split(key, 3)
    N, C, H, W = 2, 4, 16, 16
    O, KH, KW = 8, 3, 3

    # unary (bit) input stream slice, and probabilistic weight/bias externals in [-1, 1]
    x = jax.random.bernoulli(k1, 0.5, (N, C, H, W)).astype(jnp.float32)
    weight_ext = jax.random.uniform(k2, (O, C, KH, KW), jnp.float32, -1.0, 1.0)
    bias_ext = jax.random.uniform(k3, (O,), jnp.float32, -1.0, 1.0)

    y = fsu_conv2d_forward(x, weight_ext, bias_ext, stride=1, padding=1)
    y = jax.block_until_ready(y)

    y_ref = _reference(x, weight_ext, bias_ext, stride=1, padding=1)
    assert y.shape == (N, O, H, W), y.shape
    assert np.allclose(np.asarray(y), np.asarray(y_ref)), "mismatch vs plain-JAX reference"
    print("KERNEL_OK")
</pallas_src>

<mosaic_0001>
module attributes {stable_mosaic.version = 11 : i64} {
  func.func @_pc_acc_kernel(%arg0: i32, %arg1: i32, %arg2: memref<512x128xbf16, #tpu.memory_space<vmem>>, %arg3: memref<128x128xbf16, #tpu.memory_space<vmem>>, %arg4: memref<1x128xf32, #tpu.memory_space<vmem>>, %arg5: memref<512x128xbf16, #tpu.memory_space<vmem>>) attributes {dimension_semantics = [#tpu.dimension_semantics<parallel>, #tpu.dimension_semantics<parallel>], iteration_bounds = array<i64: 1, 1>, scalar_prefetch = 0 : i64, scratch_operands = 0 : i64, tpu.core_type = #tpu.core_type<tc>, window_params = [{transform_indices = @transform_0, window_bounds = array<i64: 512, 128>}, {transform_indices = @transform_1, window_bounds = array<i64: 128, 128>}, {transform_indices = @transform_2, window_bounds = array<i64: 1, 128>}, {transform_indices = @transform_3, window_bounds = array<i64: 512, 128>}]} {
    %c0 = arith.constant 0 : index
    %c0_0 = arith.constant 0 : index
    %0 = vector.load %arg2[%c0, %c0_0] : memref<512x128xbf16, #tpu.memory_space<vmem>>, vector<512x128xbf16>
    %c0_1 = arith.constant 0 : index
    %c0_2 = arith.constant 0 : index
    %1 = vector.load %arg3[%c0_1, %c0_2] : memref<128x128xbf16, #tpu.memory_space<vmem>>, vector<128x128xbf16>
    %cst = arith.constant dense<0.000000e+00> : vector<512x128xf32>
    %2 = tpu.matmul %0, %1, %cst {dimension_numbers = #tpu.dot_dimension_numbers<[1], [0], [0], [1], [0, 0, 1, 1], [], []>} : vector<512x128xbf16>, vector<128x128xbf16>, vector<512x128xf32> -> vector<512x128xf32>
    %3 = arith.extf %0 : vector<512x128xbf16> to vector<512x128xf32>
    %cst_3 = arith.constant dense<0.000000e+00> : vector<512xf32>
    %4 = vector.multi_reduction <add>, %3, %cst_3 [1] : vector<512x128xf32> to vector<512xf32>
    %5 = vector.shape_cast %4 : vector<512xf32> to vector<512x1xf32>
    %cst_4 = arith.constant 2.000000e+00 : f32
    %6 = vector.broadcast %cst_4 : f32 to vector<512x128xf32>
    %7 = arith.mulf %6, %2 : vector<512x128xf32>
    %8 = vector.broadcast %5 : vector<512x1xf32> to vector<512x128xf32>
    %9 = arith.subf %7, %8 : vector<512x128xf32>
    %c0_5 = arith.constant 0 : index
    %c0_6 = arith.constant 0 : index
    %10 = vector.load %arg4[%c0_5, %c0_6] : memref<1x128xf32, #tpu.memory_space<vmem>>, vector<1x128xf32>
    %11 = vector.broadcast %10 : vector<1x128xf32> to vector<512x128xf32>
    %12 = arith.cmpf oge, %9, %11 : vector<512x128xf32>
    %cst_7 = arith.constant 1.000000e+00 : f32
    %cst_8 = arith.constant 0.000000e+00 : f32
    %13 = vector.broadcast %cst_7 : f32 to vector<512x128xf32>
    %14 = vector.broadcast %cst_8 : f32 to vector<512x128xf32>
    %15 = arith.select %12, %13, %14 : vector<512x128xi1>, vector<512x128xf32>
    %16 = arith.truncf %15 : vector<512x128xf32> to vector<512x128xbf16>
    %c0_9 = arith.constant 0 : index
    %c0_10 = arith.constant 0 : index
    %17 = vector.load %arg5[%c0_9, %c0_10] : memref<512x128xbf16, #tpu.memory_space<vmem>>, vector<512x128xbf16>
    tpu.vector_store %arg5[%c0_9, %c0_10], %16 {strides = array<i32>} : memref<512x128xbf16, #tpu.memory_space<vmem>>, vector<512x128xbf16>,
    return
  }
  func.func @transform_0(%arg0: i32, %arg1: i32) -> (i32, i32) {
    %c0_i32 = arith.constant 0 : i32
    %c0_i32_0 = arith.constant 0 : i32
    return %arg0, %c0_i32 : i32, i32
  }
  func.func @transform_1(%arg0: i32, %arg1: i32) -> (i32, i32) {
    %c0_i32 = arith.constant 0 : i32
    %c0_i32_0 = arith.constant 0 : i32
    return %c0_i32, %arg1 : i32, i32
  }
  func.func @transform_2(%arg0: i32, %arg1: i32) -> (i32, i32) {
    %c0_i32 = arith.constant 0 : i32
    %c0_i32_0 = arith.constant 0 : i32
    return %c0_i32, %arg1 : i32, i32
  }
  func.func @transform_3(%arg0: i32, %arg1: i32) -> (i32, i32) {
    %c0_i32 = arith.constant 0 : i32
    return %arg0, %arg1 : i32, i32
  }
}

</mosaic_0001>

<llo_original>
// kernel: tpu_custom_call.1
$region0: #{tpu_custom_call.1}
  #allocation0 [shape = 'u32[]', space=smem, size = 0x4, offset = 0x4, fixed_abs, tag = 'smem constant byte address 0x4 - core index']
  #allocation1 [shape = 'u32[144,128]{1,0:T(1,128)}', space=vmem, size = 0x12000, scoped, tag = 'internal scratch']
  %s0 = inlined_call_operand.hbm [shape: bf16[512,128], index: 0, kind: input, shape index: {}]
  %s1 = inlined_call_operand.hbm [shape: bf16[128,128], index: 1, kind: input, shape index: {}]
  %s2 = inlined_call_operand.hbm [shape: f32[1,128], index: 2, kind: input, shape index: {}]
  %s3 = inlined_call_operand.hbm [shape: bf16[512,128], index: 3, kind: output, shape index: {}]
  %s4 = sld [smem:[#allocation0]]
  $region34: #{tpu_custom_call.1} parent=0
    _
  %s6 = ssub.s32 1, %s4
  %s7 = scalar_select 0, %s6, %s4
  $region1: #{tpu_custom_call.1} parent=0
    #allocation2 [shape = 'u8[131072]{0}', space=vmem, size = 0x20000, scoped, tag = 'input window, operand 0, single buffered']
    #allocation3 [shape = 's32[1]{0}', space=sflag, size = 0x4, scoped, tag = 'scoped memory for tpu_custom_call.1']
    #allocation4 [shape = 's32[1]{0}', space=sflag, size = 0x4, scoped, tag = 'scoped memory for tpu_custom_call.1']
    #allocation5 [shape = 'u8[32768]{0}', space=vmem, size = 0x8000, scoped, tag = 'input window, operand 1, single buffered']
    #allocation6 [shape = 's32[1]{0}', space=sflag, size = 0x4, scoped, tag = 'scoped memory for tpu_custom_call.1']
    #allocation7 [shape = 'u8[512]{0}', space=vmem, size = 0x400, scoped, tag = 'input window, operand 2, single buffered']
    #allocation8 [shape = 'u8[131072]{0}', space=vmem, size = 0x20000, scoped, tag = 'output window, operand 0, single buffered']
    %8 = vsyncpa [#allocation3], 0
    %9 = vsyncpa [#allocation6], 0
    %10 = vsyncpa [#allocation4], 0
    // Predicated region
    $region2: #{tpu_custom_call.1} parent=1 // pred_check
      _
    $region3: #{tpu_custom_call.1} parent=1 // pred_check_branch
      %12 = sbr.rel (0) target = $region5
    $region4: #{tpu_custom_call.1} parent=1 // pred_region
      %s14 = ssub.s32 4096, 4096
      %15 = vsyncadd [#allocation3], %s14
      %s16 = sshll.u32 [#allocation2], 4
      %s17 = int_to_ptr.vmem [resolvable:$true] %s16
      %22 = dma.hbm_to_vmem [thread:$0]  %s0, 4096, %s17, [#allocation3], 64, 64, 4
    $region5: #{tpu_custom_call.1} parent=1 // pred_fallthru
      _
    // Predicated region
    $region6: #{tpu_custom_call.1} parent=1 // pred_check
      _
    $region7: #{tpu_custom_call.1} parent=1 // pred_check_branch
      %24 = sbr.rel (0) target = $region9
    $region8: #{tpu_custom_call.1} parent=1 // pred_region
      %s26 = ssub.s32 1024, 1024
      %27 = vsyncadd [#allocation6], %s26
      %s28 = sshll.u32 [#allocation5], 4
      %s29 = int_to_ptr.vmem [resolvable:$true] %s28
      %34 = dma.hbm_to_vmem [thread:$0]  %s1, 1024, %s29, [#allocation6], 64, 64, 4
    $region9: #{tpu_custom_call.1} parent=1 // pred_fallthru
      _
    // Predicated region
    $region10: #{tpu_custom_call.1} parent=1 // pred_check
      _
    $region11: #{tpu_custom_call.1} parent=1 // pred_check_branch
      %36 = sbr.rel (0) target = $region13
    $region12: #{tpu_custom_call.1} parent=1 // pred_region
      %s38 = ssub.s32 16, 16
      %39 = vsyncadd [#allocation6], %s38
      %s41 = sshll.u32 [#allocation7], 4
      %s42 = int_to_ptr.vmem [resolvable:$true] %s41
      %44 = dma.hbm_to_vmem [thread:$0]  %s2, 16, %s42, [#allocation6]
    $region13: #{tpu_custom_call.1} parent=1 // pred_fallthru
      _
    // Predicated region
    $region14: #{tpu_custom_call.1} parent=1 // pred_check
      _
    $region15: #{tpu_custom_call.1} parent=1 // pred_check_branch
      %46 = sbr.rel (0) target = $region17
    $region16: #{tpu_custom_call.1} parent=1 // pred_region
      %47 = dma.done [#allocation3], 4096
    $region17: #{tpu_custom_call.1} parent=1 // pred_fallthru
      _
    // Predicated region
    $region18: #{tpu_custom_call.1} parent=1 // pred_check
      _
    $region19: #{tpu_custom_call.1} parent=1 // pred_check_branch
      %49 = sbr.rel (0) target = $region21
    $region20: #{tpu_custom_call.1} parent=1 // pred_region
      %50 = dma.done [#allocation6], 1024
    $region21: #{tpu_custom_call.1} parent=1 // pred_fallthru
      _
    // Predicated region
    $region22: #{tpu_custom_call.1} parent=1 // pred_check
      _
    $region23: #{tpu_custom_call.1} parent=1 // pred_check_branch
      %52 = sbr.rel (0) target = $region25
    $region24: #{tpu_custom_call.1} parent=1 // pred_region
      %53 = dma.done [#allocation6], 16
    $region25: #{tpu_custom_call.1} parent=1 // pred_fallthru
      _
    %v55 = vld [vmem:[#allocation2] sm:$0xf]
    %v56 = vld [vmem:[#allocation2 + $0x4] sm:$0xf]
    %v57 = vld [vmem:[#allocation2 + $0x8] sm:$0xf]
    %v58 = vld [vmem:[#allocation2 + $0xc] sm:$0xf]
    %v59 = vld [vmem:[#allocation2 + $0x10] sm:$0xf]
    %v60 = vld [vmem:[#allocation2 + $0x14] sm:$0xf]
    %v61 = vld [vmem:[#allocation2 + $0x18] sm:$0xf]
    %v62 = vld [vmem:[#allocation2 + $0x1c] sm:$0xf]
    %v63 = vld [vmem:[#allocation2 + $0x20] sm:$0xf]
    %v64 = vld [vmem:[#allocation2 + $0x24] sm:$0xf]
    %v65 = vld [vmem:[#allocation2 + $0x28] sm:$0xf]
    %v66 = vld [vmem:[#allocation2 + $0x2c] sm:$0xf]
    %v67 = vld [vmem:[#allocation2 + $0x30] sm:$0xf]
    %v68 = vld [vmem:[#allocation2 + $0x34] sm:$0xf]
    %v69 = vld [vmem:[#allocation2 + $0x38] sm:$0xf]
    %v70 = vld [vmem:[#allocation2 + $0x3c] sm:$0xf]
    %v71 = vld [vmem:[#allocation2 + $0x40] sm:$0xf]
    %v72 = vld [vmem:[#allocation2 + $0x44] sm:$0xf]
    %v73 = vld [vmem:[#allocation2 + $0x48] sm:$0xf]
    %v74 = vld [vmem:[#allocation2 + $0x4c] sm:$0xf]
    %v75 = vld [vmem:[#allocation2 + $0x50] sm:$0xf]
    %v76 = vld [vmem:[#allocation2 + $0x54] sm:$0xf]
    %v77 = vld [vmem:[#allocation2 + $0x58] sm:$0xf]
    %v78 = vld [vmem:[#allocation2 + $0x5c] sm:$0xf]
    %v79 = vld [vmem:[#allocation2 + $0x60] sm:$0xf]
    %v80 = vld [vmem:[#allocation2 + $0x64] sm:$0xf]
    %v81 = vld [vmem:[#allocation2 + $0x68] sm:$0xf]
    %v82 = vld [vmem:[#allocation2 + $0x6c] sm:$0xf]
    %v83 = vld [vmem:[#allocation2 + $0x70] sm:$0xf]
    %v84 = vld [vmem:[#allocation2 + $0x74] sm:$0xf]
    %v85 = vld [vmem:[#allocation2 + $0x78] sm:$0xf]
    %v86 = vld [vmem:[#allocation2 + $0x7c] sm:$0xf]
    %v87 = vld [vmem:[#allocation2 + $0x80] sm:$0xf]
    %v88 = vld [vmem:[#allocation2 + $0x84] sm:$0xf]
    %v89 = vld [vmem:[#allocation2 + $0x88] sm:$0xf]
    %v90 = vld [vmem:[#allocation2 + $0x8c] sm:$0xf]
    %v91 = vld [vmem:[#allocation2 + $0x90] sm:$0xf]
    %v92 = vld [vmem:[#allocation2 + $0x94] sm:$0xf]
    %v93 = vld [vmem:[#allocation2 + $0x98] sm:$0xf]
    %v94 = vld [vmem:[#allocation2 + $0x9c] sm:$0xf]
    %v95 = vld [vmem:[#allocation2 + $0xa0] sm:$0xf]
    %v96 = vld [vmem:[#allocation2 + $0xa4] sm:$0xf]
    %v97 = vld [vmem:[#allocation2 + $0xa8] sm:$0xf]
    %v98 = vld [vmem:[#allocation2 + $0xac] sm:$0xf]
    %v99 = vld [vmem:[#allocation2 + $0xb0] sm:$0xf]
    %v100 = vld [vmem:[#allocation2 + $0xb4] sm:$0xf]
    %v101 = vld [vmem:[#allocation2 + $0xb8] sm:$0xf]
    %v102 = vld [vmem:[#allocation2 + $0xbc] sm:$0xf]
    %v103 = vld [vmem:[#allocation2 + $0xc0] sm:$0xf]
    %v104 = vld [vmem:[#allocation2 + $0xc4] sm:$0xf]
    %v105 = vld [vmem:[#allocation2 + $0xc8] sm:$0xf]
    %v106 = vld [vmem:[#allocation2 + $0xcc] sm:$0xf]
    %v107 = vld [vmem:[#allocation2 + $0xd0] sm:$0xf]
    %v108 = vld [vmem:[#allocation2 + $0xd4] sm:$0xf]
    %v109 = vld [vmem:[#allocation2 + $0xd8] sm:$0xf]
    %v110 = vld [vmem:[#allocation2 + $0xdc] sm:$0xf]
    %v111 = vld [vmem:[#allocation2 + $0xe0] sm:$0xf]
    %v112 = vld [vmem:[#allocation2 + $0xe4] sm:$0xf]
    %v113 = vld [vmem:[#allocation2 + $0xe8] sm:$0xf]
    %v114 = vld [vmem:[#allocation2 + $0xec] sm:$0xf]
    %v115 = vld [vmem:[#allocation2 + $0xf0] sm:$0xf]
    %v116 = vld [vmem:[#allocation2 + $0xf4] sm:$0xf]
    %v117 = vld [vmem:[#allocation2 + $0xf8] sm:$0xf]
    %v118 = vld [vmem:[#allocation2 + $0xfc] sm:$0xf]
    %v119 = vld [vmem:[#allocation5] sm:$0xf]
    %v120 = vld [vmem:[#allocation5 + $0x4] sm:$0xf]
    %v121 = vld [vmem:[#allocation5 + $0x8] sm:$0xf]
    %v122 = vld [vmem:[#allocation5 + $0xc] sm:$0xf]
    %v123 = vld [vmem:[#allocation5 + $0x10] sm:$0xf]
    %v124 = vld [vmem:[#allocation5 + $0x14] sm:$0xf]
    %v125 = vld [vmem:[#allocation5 + $0x18] sm:$0xf]
    %v126 = vld [vmem:[#allocation5 + $0x1c] sm:$0xf]
    %v127 = vld [vmem:[#allocation5 + $0x20] sm:$0xf]
    %v128 = vld [vmem:[#allocation5 + $0x24] sm:$0xf]
    %v129 = vld [vmem:[#allocation5 + $0x28] sm:$0xf]
    %v130 = vld [vmem:[#allocation5 + $0x2c] sm:$0xf]
    %v131 = vld [vmem:[#allocation5 + $0x30] sm:$0xf]
    %v132 = vld [vmem:[#allocation5 + $0x34] sm:$0xf]
    %v133 = vld [vmem:[#allocation5 + $0x38] sm:$0xf]
    %v134 = vld [vmem:[#allocation5 + $0x3c] sm:$0xf]
    %v199 = vunpack.c.l.b16 %v55
    %v200 = vunpack.c.l.b16 %v56
    %v201 = vunpack.c.l.b16 %v57
    %v202 = vunpack.c.l.b16 %v58
    %v203 = vunpack.c.l.b16 %v59
    %v204 = vunpack.c.l.b16 %v60
    %v205 = vunpack.c.l.b16 %v61
    %v206 = vunpack.c.l.b16 %v62
    %v207 = vunpack.c.l.b16 %v63
    %v208 = vunpack.c.l.b16 %v64
    %v209 = vunpack.c.l.b16 %v65
    %v210 = vunpack.c.l.b16 %v66
    %v211 = vunpack.c.l.b16 %v67
    %v212 = vunpack.c.l.b16 %v68
    %v213 = vunpack.c.l.b16 %v69
    %v214 = vunpack.c.l.b16 %v70
    %v215 = vunpack.c.l.b16 %v71
    %v216 = vunpack.c.l.b16 %v72
    %v217 = vunpack.c.l.b16 %v73
    %v218 = vunpack.c.l.b16 %v74
    %v219 = vunpack.c.l.b16 %v75
    %v220 = vunpack.c.l.b16 %v76
    %v221 = vunpack.c.l.b16 %v77
    %v222 = vunpack.c.l.b16 %v78
    %v223 = vunpack.c.l.b16 %v79
    %v224 = vunpack.c.l.b16 %v80
    %v225 = vunpack.c.l.b16 %v81
    %v226 = vunpack.c.l.b16 %v82
    %v227 = vunpack.c.l.b16 %v83
    %v228 = vunpack.c.l.b16 %v84
    %v229 = vunpack.c.l.b16 %v85
    %v230 = vunpack.c.l.b16 %v86
    %v231 = vunpack.c.l.b16 %v87
    %v232 = vunpack.c.l.b16 %v88
    %v233 = vunpack.c.l.b16 %v89
    %v234 = vunpack.c.l.b16 %v90
    %v235 = vunpack.c.l.b16 %v91
    %v236 = vunpack.c.l.b16 %v92
    %v237 = vunpack.c.l.b16 %v93
    %v238 = vunpack.c.l.b16 %v94
    %v239 = vunpack.c.l.b16 %v95
    %v240 = vunpack.c.l.b16 %v96
    %v241 = vunpack.c.l.b16 %v97
    %v242 = vunpack.c.l.b16 %v98
    %v243 = vunpack.c.l.b16 %v99
    %v244 = vunpack.c.l.b16 %v100
    %v245 = vunpack.c.l.b16 %v101
    %v246 = vunpack.c.l.b16 %v102
    %v247 = vunpack.c.l.b16 %v103
    %v248 = vunpack.c.l.b16 %v104
    %v249 = vunpack.c.l.b16 %v105
    %v250 = vunpack.c.l.b16 %v106
    %v251 = vunpack.c.l.b16 %v107
    %v252 = vunpack.c.l.b16 %v108
    %v253 = vunpack.c.l.b16 %v109
    %v254 = vunpack.c.l.b16 %v110
    %v255 = vunpack.c.l.b16 %v111
    %v256 = vunpack.c.l.b16 %v112
    %v257 = vunpack.c.l.b16 %v113
    %v258 = vunpack.c.l.b16 %v114
    %v259 = vunpack.c.l.b16 %v115
    %v260 = vunpack.c.l.b16 %v116
    %v261 = vunpack.c.l.b16 %v117
    %v262 = vunpack.c.l.b16 %v118
    %v263 = vpack.c.b16 %v200, %v199
    %v264 = vpack.c.b16 %v202, %v201
    %v265 = vpack.c.b16 %v204, %v203
    %v266 = vpack.c.b16 %v206, %v205
    %v267 = vpack.c.b16 %v208, %v207
    %v268 = vpack.c.b16 %v210, %v209
    %v269 = vpack.c.b16 %v212, %v211
    %v270 = vpack.c.b16 %v214, %v213
    %v271 = vpack.c.b16 %v216, %v215
    %v272 = vpack.c.b16 %v218, %v217
    %v273 = vpack.c.b16 %v220, %v219
    %v274 = vpack.c.b16 %v222, %v221
    %v275 = vpack.c.b16 %v224, %v223
    %v276 = vpack.c.b16 %v226, %v225
    %v277 = vpack.c.b16 %v228, %v227
    %v278 = vpack.c.b16 %v230, %v229
    %v279 = vpack.c.b16 %v232, %v231
    %v280 = vpack.c.b16 %v234, %v233
    %v281 = vpack.c.b16 %v236, %v235
    %v282 = vpack.c.b16 %v238, %v237
    %v283 = vpack.c.b16 %v240, %v239
    %v284 = vpack.c.b16 %v242, %v241
    %v285 = vpack.c.b16 %v244, %v243
    %v286 = vpack.c.b16 %v246, %v245
    %v287 = vpack.c.b16 %v248, %v247
    %v288 = vpack.c.b16 %v250, %v249
    %v289 = vpack.c.b16 %v252, %v251
    %v290 = vpack.c.b16 %v254, %v253
    %v291 = vpack.c.b16 %v256, %v255
    %v292 = vpack.c.b16 %v258, %v257
    %v293 = vpack.c.b16 %v260, %v259
    %v294 = vpack.c.b16 %v262, %v261
    %v343 = vunpack.c.l.b16 %v119
    %v344 = vunpack.c.l.b16 %v120
    %v345 = vunpack.c.l.b16 %v121
    %v346 = vunpack.c.l.b16 %v122
    %v347 = vunpack.c.l.b16 %v123
    %v348 = vunpack.c.l.b16 %v124
    %v349 = vunpack.c.l.b16 %v125
    %v350 = vunpack.c.l.b16 %v126
    %v351 = vunpack.c.l.b16 %v127
    %v352 = vunpack.c.l.b16 %v128
    %v353 = vunpack.c.l.b16 %v129
    %v354 = vunpack.c.l.b16 %v130
    %v355 = vunpack.c.l.b16 %v131
    %v356 = vunpack.c.l.b16 %v132
    %v357 = vunpack.c.l.b16 %v133
    %v358 = vunpack.c.l.b16 %v134
    %v359 = vpack.c.b16 %v344, %v343
    %v360 = vpack.c.b16 %v346, %v345
    %v361 = vpack.c.b16 %v348, %v347
    %v362 = vpack.c.b16 %v350, %v349
    %v363 = vpack.c.b16 %v352, %v351
    %v364 = vpack.c.b16 %v354, %v353
    %v365 = vpack.c.b16 %v356, %v355
    %v366 = vpack.c.b16 %v358, %v357
    %375 = vmatprep.subr.bf16.mxu0 0
    %376 = vmatpush1.bf16.msra.mxu0 %v359
    %377 = vmatprep.subr.bf16.mxu0 0
    %378 = vmatpush1.bf16.msra.mxu0 %v360
    %379 = vmatprep.subr.bf16.mxu0 0
    %380 = vmatpush1.bf16.msra.mxu0 %v361
    %381 = vmatprep.subr.bf16.mxu0 0
    %382 = vmatpush1.bf16.msra.mxu0 %v362
    %383 = vmatprep.subr.bf16.mxu0 0
    %384 = vmatpush1.bf16.msra.mxu0 %v363
    %385 = vmatprep.subr.bf16.mxu0 0
    %386 = vmatpush1.bf16.msra.mxu0 %v364
    %387 = vmatprep.subr.bf16.mxu0 0
    %388 = vmatpush1.bf16.msra.mxu0 %v365
    %389 = vmatprep.subr.bf16.mxu0 0
    %390 = vmatpush1.bf16.msra.mxu0 %v366
    %391 = vmatprep.subr.bf16.mxu0 0
    %392 = vmatpush1.bf16.msra.mxu0 0
    %393 = vmatprep.subr.bf16.mxu0 0
    %394 = vmatpush1.bf16.msra.mxu0 0
    %395 = vmatprep.subr.bf16.mxu0 0
    %396 = vmatpush1.bf16.msra.mxu0 0
    %397 = vmatprep.subr.bf16.mxu0 0
    %398 = vmatpush1.bf16.msra.mxu0 0
    %399 = vmatprep.subr.bf16.mxu0 0
    %400 = vmatpush1.bf16.msra.mxu0 0
    %401 = vmatprep.subr.bf16.mxu0 0
    %402 = vmatpush1.bf16.msra.mxu0 0
    %403 = vmatprep.subr.bf16.mxu0 0
    %404 = vmatpush1.bf16.msra.mxu0 0
    %405 = vmatprep.subr.bf16.mxu0 0
    %406 = vmatpush1.bf16.msra.mxu0 0
    %407 = vmatprep.mubr.bf16.mxu0 0
    %408 = vmatmul.mubr.bf16.gmra.mrb[0].mxu0 %v263
    %v409 = vpop.f32.mrb[0].mxu0
    %v410 = vadd.f32 0.0, %v409
    %v411 = vpop.f32.mrb[0].mxu0
    %v412 = vpop.f32.mrb[0].mxu0
    %v413 = vadd.f32 0.0, %v412
    %v414 = vpop.f32.mrb[0].mxu0
    %415 = vmatprep.mubr.bf16.mxu0 0
    %416 = vmatmul.mubr.bf16.gmra.mrb[0].mxu0 %v264
    %v417 = vpop.f32.mrb[0].mxu0
    %v418 = vadd.f32 0.0, %v417
    %v419 = vpop.f32.mrb[0].mxu0
    %v420 = vpop.f32.mrb[0].mxu0
    %v421 = vadd.f32 0.0, %v420
    %v422 = vpop.f32.mrb[0].mxu0
    %423 = vmatprep.mubr.bf16.mxu0 0
    %424 = vmatmul.mubr.bf16.gmra.mrb[0].mxu0 %v265
    %v425 = vpop.f32.mrb[0].mxu0
    %v426 = vadd.f32 0.0, %v425
    %v427 = vpop.f32.mrb[0].mxu0
    %v428 = vpop.f32.mrb[0].mxu0
    %v429 = vadd.f32 0.0, %v428
    %v430 = vpop.f32.mrb[0].mxu0
    %431 = vmatprep.mubr.bf16.mxu0 0
    %432 = vmatmul.mubr.bf16.gmra.mrb[0].mxu0 %v266
    %v433 = vpop.f32.mrb[0].mxu0
    %v434 = vadd.f32 0.0, %v433
    %v435 = vpop.f32.mrb[0].mxu0
    %v436 = vpop.f32.mrb[0].mxu0
    %v437 = vadd.f32 0.0, %v436
    %v438 = vpop.f32.mrb[0].mxu0
    %439 = vmatprep.mubr.bf16.mxu0 0
    %440 = vmatmul.mubr.bf16.gmra.mrb[0].mxu0 %v267
    %v441 = vpop.f32.mrb[0].mxu0
    %v442 = vadd.f32 0.0, %v441
    %v443 = vpop.f32.mrb[0].mxu0
    %v444 = vpop.f32.mrb[0].mxu0
    %v445 = vadd.f32 0.0, %v444
    %v446 = vpop.f32.mrb[0].mxu0
    %447 = vmatprep.mubr.bf16.mxu0 0
    %448 = vmatmul.mubr.bf16.gmra.mrb[0].mxu0 %v268
    %v449 = vpop.f32.mrb[0].mxu0
    %v450 = vadd.f32 0.0, %v449
    %v451 = vpop.f32.mrb[0].mxu0
    %v452 = vpop.f32.mrb[0].mxu0
    %v453 = vadd.f32 0.0, %v452
    %v454 = vpop.f32.mrb[0].mxu0
    %455 = vmatprep.mubr.bf16.mxu0 0
    %456 = vmatmul.mubr.bf16.gmra.mrb[0].mxu0 %v269
    %v457 = vpop.f32.mrb[0].mxu0
    %v458 = vadd.f32 0.0, %v457
    %v459 = vpop.f32.mrb[0].mxu0
    %v460 = vpop.f32.mrb[0].mxu0
    %v461 = vadd.f32 0.0, %v460
    %v462 = vpop.f32.mrb[0].mxu0
    %463 = vmatprep.mubr.bf16.mxu0 0
    %464 = vmatmul.mubr.bf16.gmra.mrb[0].mxu0 %v270
    %v465 = vpop.f32.mrb[0].mxu0
    %v466 = vadd.f32 0.0, %v465
    %v467 = vpop.f32.mrb[0].mxu0
    %v468 = vpop.f32.mrb[0].mxu0
    %v469 = vadd.f32 0.0, %v468
    %v470 = vpop.f32.mrb[0].mxu0
    %471 = vmatprep.mubr.bf16.mxu0 0
    %472 = vmatmul.mubr.bf16.gmra.mrb[0].mxu0 %v271
    %v473 = vpop.f32.mrb[0].mxu0
    %v474 = vadd.f32 0.0, %v473
    %v475 = vpop.f32.mrb[0].mxu0
    %v476 = vpop.f32.mrb[0].mxu0
    %v477 = vadd.f32 0.0, %v476
    %v478 = vpop.f32.mrb[0].mxu0
    %479 = vmatprep.mubr.bf16.mxu0 0
    %480 = vmatmul.mubr.bf16.gmra.mrb[0].mxu0 %v272
    %v481 = vpop.f32.mrb[0].mxu0
    %v482 = vadd.f32 0.0, %v481
    %v483 = vpop.f32.mrb[0].mxu0
    %v484 = vpop.f32.mrb[0].mxu0
    %v485 = vadd.f32 0.0, %v484
    %v486 = vpop.f32.mrb[0].mxu0
    %487 = vmatprep.mubr.bf16.mxu0 0
    %488 = vmatmul.mubr.bf16.gmra.mrb[0].mxu0 %v273
    %v489 = vpop.f32.mrb[0].mxu0
    %v490 = vadd.f32 0.0, %v489
    %v491 = vpop.f32.mrb[0].mxu0
    %v492 = vpop.f32.mrb[0].mxu0
    %v493 = vadd.f32 0.0, %v492
    %v494 = vpop.f32.mrb[0].mxu0
    %495 = vmatprep.mubr.bf16.mxu0 0
    %496 = vmatmul.mubr.bf16.gmra.mrb[0].mxu0 %v274
    %v497 = vpop.f32.mrb[0].mxu0
    %v498 = vadd.f32 0.0, %v497
    %v499 = vpop.f32.mrb[0].mxu0
    %v500 = vpop.f32.mrb[0].mxu0
    %v501 = vadd.f32 0.0, %v500
    %v502 = vpop.f32.mrb[0].mxu0
    %503 = vmatprep.mubr.bf16.mxu0 0
    %504 = vmatmul.mubr.bf16.gmra.mrb[0].mxu0 %v275
    %v505 = vpop.f32.mrb[0].mxu0
    %v506 = vadd.f32 0.0, %v505
    %v507 = vpop.f32.mrb[0].mxu0
    %v508 = vpop.f32.mrb[0].mxu0
    %v509 = vadd.f32 0.0, %v508
    %v510 = vpop.f32.mrb[0].mxu0
    %511 = vmatprep.mubr.bf16.mxu0 0
    %512 = vmatmul.mubr.bf16.gmra.mrb[0].mxu0 %v276
    %v513 = vpop.f32.mrb[0].mxu0
    %v514 = vadd.f32 0.0, %v513
    %v515 = vpop.f32.mrb[0].mxu0
    %v516 = vpop.f32.mrb[0].mxu0
    %v517 = vadd.f32 0.0, %v516
    %v518 = vpop.f32.mrb[0].mxu0
    %519 = vmatprep.mubr.bf16.mxu0 0
    %520 = vmatmul.mubr.bf16.gmra.mrb[0].mxu0 %v277
    %v521 = vpop.f32.mrb[0].mxu0
    %v522 = vadd.f32 0.0, %v521
    %v523 = vpop.f32.mrb[0].mxu0
    %v524 = vpop.f32.mrb[0].mxu0
    %v525 = vadd.f32 0.0, %v524
    %v526 = vpop.f32.mrb[0].mxu0
    %527 = vmatprep.mubr.bf16.mxu0 0
    %528 = vmatmul.mubr.bf16.gmra.mrb[0].mxu0 %v278
    %v529 = vpop.f32.mrb[0].mxu0
    %v530 = vadd.f32 0.0, %v529
    %v531 = vpop.f32.mrb[0].mxu0
    %v532 = vpop.f32.mrb[0].mxu0
    %v533 = vadd.f32 0.0, %v532
    %v534 = vpop.f32.mrb[0].mxu0
    %535 = vmatprep.mubr.bf16.mxu0 0
    %536 = vmatmul.mubr.bf16.gmra.mrb[0].mxu0 %v279
    %v537 = vpop.f32.mrb[0].mxu0
    %v538 = vadd.f32 0.0, %v537
    %v539 = vpop.f32.mrb[0].mxu0
    %v540 = vpop.f32.mrb[0].mxu0
    %v541 = vadd.f32 0.0, %v540
    %v542 = vpop.f32.mrb[0].mxu0
    %543 = vmatprep.mubr.bf16.mxu0 0
    %544 = vmatmul.mubr.bf16.gmra.mrb[0].mxu0 %v280
    %v545 = vpop.f32.mrb[0].mxu0
    %v546 = vadd.f32 0.0, %v545
    %v547 = vpop.f32.mrb[0].mxu0
    %v548 = vpop.f32.mrb[0].mxu0
    %v549 = vadd.f32 0.0, %v548
    %v550 = vpop.f32.mrb[0].mxu0
    %551 = vmatprep.mubr.bf16.mxu0 0
    %552 = vmatmul.mubr.bf16.gmra.mrb[0].mxu0 %v281
    %v553 = vpop.f32.mrb[0].mxu0
    %v554 = vadd.f32 0.0, %v553
    %v555 = vpop.f32.mrb[0].mxu0
    %v556 = vpop.f32.mrb[0].mxu0
    %v557 = vadd.f32 0.0, %v556
    %v558 = vpop.f32.mrb[0].mxu0
    %559 = vmatprep.mubr.bf16.mxu0 0
    %560 = vmatmul.mubr.bf16.gmra.mrb[0].mxu0 %v282
    %v561 = vpop.f32.mrb[0].mxu0
    %v562 = vadd.f32 0.0, %v561
    %v563 = vpop.f32.mrb[0].mxu0
    %v564 = vpop.f32.mrb[0].mxu0
    %v565 = vadd.f32 0.0, %v564
    %v566 = vpop.f32.mrb[0].mxu0
    %567 = vmatprep.mubr.bf16.mxu0 0
    %568 = vmatmul.mubr.bf16.gmra.mrb[0].mxu0 %v283
    %v569 = vpop.f32.mrb[0].mxu0
    %v570 = vadd.f32 0.0, %v569
    %v571 = vpop.f32.mrb[0].mxu0
    %v572 = vpop.f32.mrb[0].mxu0
    %v573 = vadd.f32 0.0, %v572
    %v574 = vpop.f32.mrb[0].mxu0
    %575 = vmatprep.mubr.bf16.mxu0 0
    %576 = vmatmul.mubr.bf16.gmra.mrb[0].mxu0 %v284
    %v577 = vpop.f32.mrb[0].mxu0
    %v578 = vadd.f32 0.0, %v577
    %v579 = vpop.f32.mrb[0].mxu0
    %v580 = vpop.f32.mrb[0].mxu0
    %v581 = vadd.f32 0.0, %v580
    %v582 = vpop.f32.mrb[0].mxu0
    %583 = vmatprep.mubr.bf16.mxu0 0
    %584 = vmatmul.mubr.bf16.gmra.mrb[0].mxu0 %v285
    %v585 = vpop.f32.mrb[0].mxu0
    %v586 = vadd.f32 0.0, %v585
    %v587 = vpop.f32.mrb[0].mxu0
    %v588 = vpop.f32.mrb[0].mxu0
    %v589 = vadd.f32 0.0, %v588
    %v590 = vpop.f32.mrb[0].mxu0
    %591 = vmatprep.mubr.bf16.mxu0 0
    %592 = vmatmul.mubr.bf16.gmra.mrb[0].mxu0 %v286
    %v593 = vpop.f32.mrb[0].mxu0
    %v594 = vadd.f32 0.0, %v593
    %v595 = vpop.f32.mrb[0].mxu0
    %v596 = vpop.f32.mrb[0].mxu0
    %v597 = vadd.f32 0.0, %v596
    %v598 = vpop.f32.mrb[0].mxu0
    %599 = vmatprep.mubr.bf16.mxu0 0
    %600 = vmatmul.mubr.bf16.gmra.mrb[0].mxu0 %v287
    %v601 = vpop.f32.mrb[0].mxu0
    %v602 = vadd.f32 0.0, %v601
    %v603 = vpop.f32.mrb[0].mxu0
    %v604 = vpop.f32.mrb[0].mxu0
    %v605 = vadd.f32 0.0, %v604
    %v606 = vpop.f32.mrb[0].mxu0
    %607 = vmatprep.mubr.bf16.mxu0 0
    %608 = vmatmul.mubr.bf16.gmra.mrb[0].mxu0 %v288
    %v609 = vpop.f32.mrb[0].mxu0
    %v610 = vadd.f32 0.0, %v609
    %v611 = vpop.f32.mrb[0].mxu0
    %v612 = vpop.f32.mrb[0].mxu0
    %v613 = vadd.f32 0.0, %v612
    %v614 = vpop.f32.mrb[0].mxu0
    %615 = vmatprep.mubr.bf16.mxu0 0
    %616 = vmatmul.mubr.bf16.gmra.mrb[0].mxu0 %v289
    %v617 = vpop.f32.mrb[0].mxu0
    %v618 = vadd.f32 0.0, %v617
    %v619 = vpop.f32.mrb[0].mxu0
    %v620 = vpop.f32.mrb[0].mxu0
    %v621 = vadd.f32 0.0, %v620
    %v622 = vpop.f32.mrb[0].mxu0
    %623 = vmatprep.mubr.bf16.mxu0 0
    %624 = vmatmul.mubr.bf16.gmra.mrb[0].mxu0 %v290
    %v625 = vpop.f32.mrb[0].mxu0
    %v626 = vadd.f32 0.0, %v625
    %v627 = vpop.f32.mrb[0].mxu0
    %v628 = vpop.f32.mrb[0].mxu0
    %v629 = vadd.f32 0.0, %v628
    %v630 = vpop.f32.mrb[0].mxu0
    %631 = vmatprep.mubr.bf16.mxu0 0
    %632 = vmatmul.mubr.bf16.gmra.mrb[0].mxu0 %v291
    %v633 = vpop.f32.mrb[0].mxu0
    %v634 = vadd.f32 0.0, %v633
    %v635 = vpop.f32.mrb[0].mxu0
    %v636 = vpop.f32.mrb[0].mxu0
    %v637 = vadd.f32 0.0, %v636
    %v638 = vpop.f32.mrb[0].mxu0
    %639 = vmatprep.mubr.bf16.mxu0 0
    %640 = vmatmul.mubr.bf16.gmra.mrb[0].mxu0 %v292
    %v641 = vpop.f32.mrb[0].mxu0
    %v642 = vadd.f32 0.0, %v641
    %v643 = vpop.f32.mrb[0].mxu0
    %v644 = vpop.f32.mrb[0].mxu0
    %v645 = vadd.f32 0.0, %v644
    %v646 = vpop.f32.mrb[0].mxu0
    %647 = vmatprep.mubr.bf16.mxu0 0
    %648 = vmatmul.mubr.bf16.gmra.mrb[0].mxu0 %v293
    %v649 = vpop.f32.mrb[0].mxu0
    %v650 = vadd.f32 0.0, %v649
    %v651 = vpop.f32.mrb[0].mxu0
    %v652 = vpop.f32.mrb[0].mxu0
    %v653 = vadd.f32 0.0, %v652
    %v654 = vpop.f32.mrb[0].mxu0
    %655 = vmatprep.mubr.bf16.mxu0 0
    %656 = vmatmul.mubr.bf16.gmra.mrb[0].mxu0 %v294
    %v657 = vpop.f32.mrb[0].mxu0
    %v658 = vadd.f32 0.0, %v657
    %v659 = vpop.f32.mrb[0].mxu0
    %v660 = vpop.f32.mrb[0].mxu0
    %v661 = vadd.f32 0.0, %v660
    %v662 = vpop.f32.mrb[0].mxu0
    %663 = vdwg.mxu0
    %v664 = vunpack.c.l.bf16 %v55
    %v665 = vunpack.c.l.bf16 %v56
    %v666 = vunpack.c.l.bf16 %v57
    %v667 = vunpack.c.l.bf16 %v58
    %v668 = vunpack.c.l.bf16 %v59
    %v669 = vunpack.c.l.bf16 %v60
    %v670 = vunpack.c.l.bf16 %v61
    %v671 = vunpack.c.l.bf16 %v62
    %v672 = vunpack.c.l.bf16 %v63
    %v673 = vunpack.c.l.bf16 %v64
    %v674 = vunpack.c.l.bf16 %v65
    %v675 = vunpack.c.l.bf16 %v66
    %v676 = vunpack.c.l.bf16 %v67
    %v677 = vunpack.c.l.bf16 %v68
    %v678 = vunpack.c.l.bf16 %v69
    %v679 = vunpack.c.l.bf16 %v70
    %v680 = vunpack.c.l.bf16 %v71
    %v681 = vunpack.c.l.bf16 %v72
    %v682 = vunpack.c.l.bf16 %v73
    %v683 = vunpack.c.l.bf16 %v74
    %v684 = vunpack.c.l.bf16 %v75
    %v685 = vunpack.c.l.bf16 %v76
    %v686 = vunpack.c.l.bf16 %v77
    %v687 = vunpack.c.l.bf16 %v78
    %v688 = vunpack.c.l.bf16 %v79
    %v689 = vunpack.c.l.bf16 %v80
    %v690 = vunpack.c.l.bf16 %v81
    %v691 = vunpack.c.l.bf16 %v82
    %v692 = vunpack.c.l.bf16 %v83
    %v693 = vunpack.c.l.bf16 %v84
    %v694 = vunpack.c.l.bf16 %v85
    %v695 = vunpack.c.l.bf16 %v86
    %v696 = vunpack.c.l.bf16 %v87
    %v697 = vunpack.c.l.bf16 %v88
    %v698 = vunpack.c.l.bf16 %v89
    %v699 = vunpack.c.l.bf16 %v90
    %v700 = vunpack.c.l.bf16 %v91
    %v701 = vunpack.c.l.bf16 %v92
    %v702 = vunpack.c.l.bf16 %v93
    %v703 = vunpack.c.l.bf16 %v94
    %v704 = vunpack.c.l.bf16 %v95
    %v705 = vunpack.c.l.bf16 %v96
    %v706 = vunpack.c.l.bf16 %v97
    %v707 = vunpack.c.l.bf16 %v98
    %v708 = vunpack.c.l.bf16 %v99
    %v709 = vunpack.c.l.bf16 %v100
    %v710 = vunpack.c.l.bf16 %v101
    %v711 = vunpack.c.l.bf16 %v102
    %v712 = vunpack.c.l.bf16 %v103
    %v713 = vunpack.c.l.bf16 %v104
    %v714 = vunpack.c.l.bf16 %v105
    %v715 = vunpack.c.l.bf16 %v106
    %v716 = vunpack.c.l.bf16 %v107
    %v717 = vunpack.c.l.bf16 %v108
    %v718 = vunpack.c.l.bf16 %v109
    %v719 = vunpack.c.l.bf16 %v110
    %v720 = vunpack.c.l.bf16 %v111
    %v721 = vunpack.c.l.bf16 %v112
    %v722 = vunpack.c.l.bf16 %v113
    %v723 = vunpack.c.l.bf16 %v114
    %v724 = vunpack.c.l.bf16 %v115
    %v725 = vunpack.c.l.bf16 %v116
    %v726 = vunpack.c.l.bf16 %v117
    %v727 = vunpack.c.l.bf16 %v118
    %728 = vadd.xlane.f32.xlu0 %v664
    %v729 = vpop.xlane.xlu0 %728
    %730 = vadd.xlane.f32.xlu0 %v665
    %v731 = vpop.xlane.xlu0 %730
    %732 = vadd.xlane.f32.xlu0 %v666
    %v733 = vpop.xlane.xlu0 %732
    %734 = vadd.xlane.f32.xlu0 %v667
    %v735 = vpop.xlane.xlu0 %734
    %736 = vadd.xlane.f32.xlu0 %v668
    %v737 = vpop.xlane.xlu0 %736
    %738 = vadd.xlane.f32.xlu0 %v669
    %v739 = vpop.xlane.xlu0 %738
    %740 = vadd.xlane.f32.xlu0 %v670
    %v741 = vpop.xlane.xlu0 %740
    %742 = vadd.xlane.f32.xlu0 %v671
    %v743 = vpop.xlane.xlu0 %742
    %744 = vadd.xlane.f32.xlu0 %v672
    %v745 = vpop.xlane.xlu0 %744
    %746 = vadd.xlane.f32.xlu0 %v673
    %v747 = vpop.xlane.xlu0 %746
    %748 = vadd.xlane.f32.xlu0 %v674
    %v749 = vpop.xlane.xlu0 %748
    %750 = vadd.xlane.f32.xlu0 %v675
    %v751 = vpop.xlane.xlu0 %750
    %752 = vadd.xlane.f32.xlu0 %v676
    %v753 = vpop.xlane.xlu0 %752
    %754 = vadd.xlane.f32.xlu0 %v677
    %v755 = vpop.xlane.xlu0 %754
    %756 = vadd.xlane.f32.xlu0 %v678
    %v757 = vpop.xlane.xlu0 %756
    %758 = vadd.xlane.f32.xlu0 %v679
    %v759 = vpop.xlane.xlu0 %758
    %760 = vadd.xlane.f32.xlu0 %v680
    %v761 = vpop.xlane.xlu0 %760
    %762 = vadd.xlane.f32.xlu0 %v681
    %v763 = vpop.xlane.xlu0 %762
    %764 = vadd.xlane.f32.xlu0 %v682
    %v765 = vpop.xlane.xlu0 %764
    %766 = vadd.xlane.f32.xlu0 %v683
    %v767 = vpop.xlane.xlu0 %766
    %768 = vadd.xlane.f32.xlu0 %v684
    %v769 = vpop.xlane.xlu0 %768
    %770 = vadd.xlane.f32.xlu0 %v685
    %v771 = vpop.xlane.xlu0 %770
    %772 = vadd.xlane.f32.xlu0 %v686
    %v773 = vpop.xlane.xlu0 %772
    %774 = vadd.xlane.f32.xlu0 %v687
    %v775 = vpop.xlane.xlu0 %774
    %776 = vadd.xlane.f32.xlu0 %v688
    %v777 = vpop.xlane.xlu0 %776
    %778 = vadd.xlane.f32.xlu0 %v689
    %v779 = vpop.xlane.xlu0 %778
    %780 = vadd.xlane.f32.xlu0 %v690
    %v781 = vpop.xlane.xlu0 %780
    %782 = vadd.xlane.f32.xlu0 %v691
    %v783 = vpop.xlane.xlu0 %782
    %784 = vadd.xlane.f32.xlu0 %v692
    %v785 = vpop.xlane.xlu0 %784
    %786 = vadd.xlane.f32.xlu0 %v693
    %v787 = vpop.xlane.xlu0 %786
    %788 = vadd.xlane.f32.xlu0 %v694
    %v789 = vpop.xlane.xlu0 %788
    %790 = vadd.xlane.f32.xlu0 %v695
    %v791 = vpop.xlane.xlu0 %790
    %792 = vadd.xlane.f32.xlu0 %v696
    %v793 = vpop.xlane.xlu0 %792
    %794 = vadd.xlane.f32.xlu0 %v697
    %v795 = vpop.xlane.xlu0 %794
    %796 = vadd.xlane.f32.xlu0 %v698
    %v797 = vpop.xlane.xlu0 %796
    %798 = vadd.xlane.f32.xlu0 %v699
    %v799 = vpop.xlane.xlu0 %798
    %800 = vadd.xlane.f32.xlu0 %v700
    %v801 = vpop.xlane.xlu0 %800
    %802 = vadd.xlane.f32.xlu0 %v701
    %v803 = vpop.xlane.xlu0 %802
    %804 = vadd.xlane.f32.xlu0 %v702
    %v805 = vpop.xlane.xlu0 %804
    %806 = vadd.xlane.f32.xlu0 %v703
    %v807 = vpop.xlane.xlu0 %806
    %808 = vadd.xlane.f32.xlu0 %v704
    %v809 = vpop.xlane.xlu0 %808
    %810 = vadd.xlane.f32.xlu0 %v705
    %v811 = vpop.xlane.xlu0 %810
    %812 = vadd.xlane.f32.xlu0 %v706
    %v813 = vpop.xlane.xlu0 %812
    %814 = vadd.xlane.f32.xlu0 %v707
    %v815 = vpop.xlane.xlu0 %814
    %816 = vadd.xlane.f32.xlu0 %v708
    %v817 = vpop.xlane.xlu0 %816
    %818 = vadd.xlane.f32.xlu0 %v709
    %v819 = vpop.xlane.xlu0 %818
    %820 = vadd.xlane.f32.xlu0 %v710
    %v821 = vpop.xlane.xlu0 %820
    %822 = vadd.xlane.f32.xlu0 %v711
    %v823 = vpop.xlane.xlu0 %822
    %824 = vadd.xlane.f32.xlu0 %v712
    %v825 = vpop.xlane.xlu0 %824
    %826 = vadd.xlane.f32.xlu0 %v713
    %v827 = vpop.xlane.xlu0 %826
    %828 = vadd.xlane.f32.xlu0 %v714
    %v829 = vpop.xlane.xlu0 %828
    %830 = vadd.xlane.f32.xlu0 %v715
    %v831 = vpop.xlane.xlu0 %830
    %832 = vadd.xlane.f32.xlu0 %v716
    %v833 = vpop.xlane.xlu0 %832
    %834 = vadd.xlane.f32.xlu0 %v717
    %v835 = vpop.xlane.xlu0 %834
    %836 = vadd.xlane.f32.xlu0 %v718
    %v837 = vpop.xlane.xlu0 %836
    %838 = vadd.xlane.f32.xlu0 %v719
    %v839 = vpop.xlane.xlu0 %838
    %840 = vadd.xlane.f32.xlu0 %v720
    %v841 = vpop.xlane.xlu0 %840
    %842 = vadd.xlane.f32.xlu0 %v721
    %v843 = vpop.xlane.xlu0 %842
    %844 = vadd.xlane.f32.xlu0 %v722
    %v845 = vpop.xlane.xlu0 %844
    %846 = vadd.xlane.f32.xlu0 %v723
    %v847 = vpop.xlane.xlu0 %846
    %848 = vadd.xlane.f32.xlu0 %v724
    %v849 = vpop.xlane.xlu0 %848
    %850 = vadd.xlane.f32.xlu0 %v725
    %v851 = vpop.xlane.xlu0 %850
    %852 = vadd.xlane.f32.xlu0 %v726
    %v853 = vpop.xlane.xlu0 %852
    %854 = vadd.xlane.f32.xlu0 %v727
    %v855 = vpop.xlane.xlu0 %854
    %v856 = vmul.f32 %v410, 2.0
    %v857 = vmul.f32 %v413, 2.0
    %v858 = vmul.f32 %v418, 2.0
    %v859 = vmul.f32 %v421, 2.0
    %v860 = vmul.f32 %v426, 2.0
    %v861 = vmul.f32 %v429, 2.0
    %v862 = vmul.f32 %v434, 2.0
    %v863 = vmul.f32 %v437, 2.0
    %v864 = vmul.f32 %v442, 2.0
    %v865 = vmul.f32 %v445, 2.0
    %v866 = vmul.f32 %v450, 2.0
    %v867 = vmul.f32 %v453, 2.0
    %v868 = vmul.f32 %v458, 2.0
    %v869 = vmul.f32 %v461, 2.0
    %v870 = vmul.f32 %v466, 2.0
    %v871 = vmul.f32 %v469, 2.0
    %v872 = vmul.f32 %v474, 2.0
    %v873 = vmul.f32 %v477, 2.0
    %v874 = vmul.f32 %v482, 2.0
    %v875 = vmul.f32 %v485, 2.0
    %v876 = vmul.f32 %v490, 2.0
    %v877 = vmul.f32 %v493, 2.0
    %v878 = vmul.f32 %v498, 2.0
    %v879 = vmul.f32 %v501, 2.0
    %v880 = vmul.f32 %v506, 2.0
    %v881 = vmul.f32 %v509, 2.0
    %v882 = vmul.f32 %v514, 2.0
    %v883 = vmul.f32 %v517, 2.0
    %v884 = vmul.f32 %v522, 2.0
    %v885 = vmul.f32 %v525, 2.0
    %v886 = vmul.f32 %v530, 2.0
    %v887 = vmul.f32 %v533, 2.0
    %v888 = vmul.f32 %v538, 2.0
    %v889 = vmul.f32 %v541, 2.0
    %v890 = vmul.f32 %v546, 2.0
    %v891 = vmul.f32 %v549, 2.0
    %v892 = vmul.f32 %v554, 2.0
    %v893 = vmul.f32 %v557, 2.0
    %v894 = vmul.f32 %v562, 2.0
    %v895 = vmul.f32 %v565, 2.0
    %v896 = vmul.f32 %v570, 2.0
    %v897 = vmul.f32 %v573, 2.0
    %v898 = vmul.f32 %v578, 2.0
    %v899 = vmul.f32 %v581, 2.0
    %v900 = vmul.f32 %v586, 2.0
    %v901 = vmul.f32 %v589, 2.0
    %v902 = vmul.f32 %v594, 2.0
    %v903 = vmul.f32 %v597, 2.0
    %v904 = vmul.f32 %v602, 2.0
    %v905 = vmul.f32 %v605, 2.0
    %v906 = vmul.f32 %v610, 2.0
    %v907 = vmul.f32 %v613, 2.0
    %v908 = vmul.f32 %v618, 2.0
    %v909 = vmul.f32 %v621, 2.0
    %v910 = vmul.f32 %v626, 2.0
    %v911 = vmul.f32 %v629, 2.0
    %v912 = vmul.f32 %v634, 2.0
    %v913 = vmul.f32 %v637, 2.0
    %v914 = vmul.f32 %v642, 2.0
    %v915 = vmul.f32 %v645, 2.0
    %v916 = vmul.f32 %v650, 2.0
    %v917 = vmul.f32 %v653, 2.0
    %v918 = vmul.f32 %v658, 2.0
    %v919 = vmul.f32 %v661, 2.0
    %v920 = vsub.f32 %v856, %v729
    %v921 = vsub.f32 %v857, %v731
    %v922 = vsub.f32 %v858, %v733
    %v923 = vsub.f32 %v859, %v735
    %v924 = vsub.f32 %v860, %v737
    %v925 = vsub.f32 %v861, %v739
    %v926 = vsub.f32 %v862, %v741
    %v927 = vsub.f32 %v863, %v743
    %v928 = vsub.f32 %v864, %v745
    %v929 = vsub.f32 %v865, %v747
    %v930 = vsub.f32 %v866, %v749
    %v931 = vsub.f32 %v867, %v751
    %v932 = vsub.f32 %v868, %v753
    %v933 = vsub.f32 %v869, %v755
    %v934 = vsub.f32 %v870, %v757
    %v935 = vsub.f32 %v871, %v759
    %v936 = vsub.f32 %v872, %v761
    %v937 = vsub.f32 %v873, %v763
    %v938 = vsub.f32 %v874, %v765
    %v939 = vsub.f32 %v875, %v767
    %v940 = vsub.f32 %v876, %v769
    %v941 = vsub.f32 %v877, %v771
    %v942 = vsub.f32 %v878, %v773
    %v943 = vsub.f32 %v879, %v775
    %v944 = vsub.f32 %v880, %v777
    %v945 = vsub.f32 %v881, %v779
    %v946 = vsub.f32 %v882, %v781
    %v947 = vsub.f32 %v883, %v783
    %v948 = vsub.f32 %v884, %v785
    %v949 = vsub.f32 %v885, %v787
    %v950 = vsub.f32 %v886, %v789
    %v951 = vsub.f32 %v887, %v791
    %v952 = vsub.f32 %v888, %v793
    %v953 = vsub.f32 %v889, %v795
    %v954 = vsub.f32 %v890, %v797
    %v955 = vsub.f32 %v891, %v799
    %v956 = vsub.f32 %v892, %v801
    %v957 = vsub.f32 %v893, %v803
    %v958 = vsub.f32 %v894, %v805
    %v959 = vsub.f32 %v895, %v807
    %v960 = vsub.f32 %v896, %v809
    %v961 = vsub.f32 %v897, %v811
    %v962 = vsub.f32 %v898, %v813
    %v963 = vsub.f32 %v899, %v815
    %v964 = vsub.f32 %v900, %v817
    %v965 = vsub.f32 %v901, %v819
    %v966 = vsub.f32 %v902, %v821
    %v967 = vsub.f32 %v903, %v823
    %v968 = vsub.f32 %v904, %v825
    %v969 = vsub.f32 %v905, %v827
    %v970 = vsub.f32 %v906, %v829
    %v971 = vsub.f32 %v907, %v831
    %v972 = vsub.f32 %v908, %v833
    %v973 = vsub.f32 %v909, %v835
    %v974 = vsub.f32 %v910, %v837
    %v975 = vsub.f32 %v911, %v839
    %v976 = vsub.f32 %v912, %v841
    %v977 = vsub.f32 %v913, %v843
    %v978 = vsub.f32 %v914, %v845
    %v979 = vsub.f32 %v915, %v847
    %v980 = vsub.f32 %v916, %v849
    %v981 = vsub.f32 %v917, %v851
    %v982 = vsub.f32 %v918, %v853
    %v983 = vsub.f32 %v919, %v855
    %v984 = vld [vmem:[#allocation7] sm:$0x1]
    %v986 = vlaneseq
    %v987 = vshrl.u32 %v986, 7
    %v988 = vsub.s32 0, %v987
    %v989 = vrot.slane %v984, %v988
    %vm991 = vcmp.ge.f32.partialorder %v920, %v989
    %vm992 = vcmp.ge.f32.partialorder %v921, %v989
    %vm993 = vcmp.ge.f32.partialorder %v922, %v989
    %vm994 = vcmp.ge.f32.partialorder %v923, %v989
    %vm995 = vcmp.ge.f32.partialorder %v924, %v989
    %vm996 = vcmp.ge.f32.partialorder %v925, %v989
    %vm997 = vcmp.ge.f32.partialorder %v926, %v989
    %vm998 = vcmp.ge.f32.partialorder %v927, %v989
    %vm999 = vcmp.ge.f32.partialorder %v928, %v989
    %vm1000 = vcmp.ge.f32.partialorder %v929, %v989
    %vm1001 = vcmp.ge.f32.partialorder %v930, %v989
    %vm1002 = vcmp.ge.f32.partialorder %v931, %v989
    %vm1003 = vcmp.ge.f32.partialorder %v932, %v989
    %vm1004 = vcmp.ge.f32.partialorder %v933, %v989
    %vm1005 = vcmp.ge.f32.partialorder %v934, %v989
    %vm1006 = vcmp.ge.f32.partialorder %v935, %v989
    %vm1007 = vcmp.ge.f32.partialorder %v936, %v989
    %vm1008 = vcmp.ge.f32.partialorder %v937, %v989
    %vm1009 = vcmp.ge.f32.partialorder %v938, %v989
    %vm1010 = vcmp.ge.f32.partialorder %v939, %v989
    %vm1011 = vcmp.ge.f32.partialorder %v940, %v989
    %vm1012 = vcmp.ge.f32.partialorder %v941, %v989
    %vm1013 = vcmp.ge.f32.partialorder %v942, %v989
    %vm1014 = vcmp.ge.f32.partialorder %v943, %v989
    %vm1015 = vcmp.ge.f32.partialorder %v944, %v989
    %vm1016 = vcmp.ge.f32.partialorder %v945, %v989
    %vm1017 = vcmp.ge.f32.partialorder %v946, %v989
    %vm1018 = vcmp.ge.f32.partialorder %v947, %v989
    %vm1019 = vcmp.ge.f32.partialorder %v948, %v989
    %vm1020 = vcmp.ge.f32.partialorder %v949, %v989
    %vm1021 = vcmp.ge.f32.partialorder %v950, %v989
    %vm1022 = vcmp.ge.f32.partialorder %v951, %v989
    %vm1023 = vcmp.ge.f32.partialorder %v952, %v989
    %vm1024 = vcmp.ge.f32.partialorder %v953, %v989
    %vm1025 = vcmp.ge.f32.partialorder %v954, %v989
    %vm1026 = vcmp.ge.f32.partialorder %v955, %v989
    %vm1027 = vcmp.ge.f32.partialorder %v956, %v989
    %vm1028 = vcmp.ge.f32.partialorder %v957, %v989
    %vm1029 = vcmp.ge.f32.partialorder %v958, %v989
    %vm1030 = vcmp.ge.f32.partialorder %v959, %v989
    %vm1031 = vcmp.ge.f32.partialorder %v960, %v989
    %vm1032 = vcmp.ge.f32.partialorder %v961, %v989
    %vm1033 = vcmp.ge.f32.partialorder %v962, %v989
    %vm1034 = vcmp.ge.f32.partialorder %v963, %v989
    %vm1035 = vcmp.ge.f32.partialorder %v964, %v989
    %vm1036 = vcmp.ge.f32.partialorder %v965, %v989
    %vm1037 = vcmp.ge.f32.partialorder %v966, %v989
    %vm1038 = vcmp.ge.f32.partialorder %v967, %v989
    %vm1039 = vcmp.ge.f32.partialorder %v968, %v989
    %vm1040 = vcmp.ge.f32.partialorder %v969, %v989
    %vm1041 = vcmp.ge.f32.partialorder %v970, %v989
    %vm1042 = vcmp.ge.f32.partialorder %v971, %v989
    %vm1043 = vcmp.ge.f32.partialorder %v972, %v989
    %vm1044 = vcmp.ge.f32.partialorder %v973, %v989
    %vm1045 = vcmp.ge.f32.partialorder %v974, %v989
    %vm1046 = vcmp.ge.f32.partialorder %v975, %v989
    %vm1047 = vcmp.ge.f32.partialorder %v976, %v989
    %vm1048 = vcmp.ge.f32.partialorder %v977, %v989
    %vm1049 = vcmp.ge.f32.partialorder %v978, %v989
    %vm1050 = vcmp.ge.f32.partialorder %v979, %v989
    %vm1051 = vcmp.ge.f32.partialorder %v980, %v989
    %vm1052 = vcmp.ge.f32.partialorder %v981, %v989
    %vm1053 = vcmp.ge.f32.partialorder %v982, %v989
    %vm1054 = vcmp.ge.f32.partialorder %v983, %v989
    %v1055 = vsel %vm991, 1.0, 0.0
    %v1056 = vsel %vm992, 1.0, 0.0
    %v1057 = vsel %vm993, 1.0, 0.0
    %v1058 = vsel %vm994, 1.0, 0.0
    %v1059 = vsel %vm995, 1.0, 0.0
    %v1060 = vsel %vm996, 1.0, 0.0
    %v1061 = vsel %vm997, 1.0, 0.0
    %v1062 = vsel %vm998, 1.0, 0.0
    %v1063 = vsel %vm999, 1.0, 0.0
    %v1064 = vsel %vm1000, 1.0, 0.0
    %v1065 = vsel %vm1001, 1.0, 0.0
    %v1066 = vsel %vm1002, 1.0, 0.0
    %v1067 = vsel %vm1003, 1.0, 0.0
    %v1068 = vsel %vm1004, 1.0, 0.0
    %v1069 = vsel %vm1005, 1.0, 0.0
    %v1070 = vsel %vm1006, 1.0, 0.0
    %v1071 = vsel %vm1007, 1.0, 0.0
    %v1072 = vsel %vm1008, 1.0, 0.0
    %v1073 = vsel %vm1009, 1.0, 0.0
    %v1074 = vsel %vm1010, 1.0, 0.0
    %v1075 = vsel %vm1011, 1.0, 0.0
    %v1076 = vsel %vm1012, 1.0, 0.0
    %v1077 = vsel %vm1013, 1.0, 0.0
    %v1078 = vsel %vm1014, 1.0, 0.0
    %v1079 = vsel %vm1015, 1.0, 0.0
    %v1080 = vsel %vm1016, 1.0, 0.0
    %v1081 = vsel %vm1017, 1.0, 0.0
    %v1082 = vsel %vm1018, 1.0, 0.0
    %v1083 = vsel %vm1019, 1.0, 0.0
    %v1084 = vsel %vm1020, 1.0, 0.0
    %v1085 = vsel %vm1021, 1.0, 0.0
    %v1086 = vsel %vm1022, 1.0, 0.0
    %v1087 = vsel %vm1023, 1.0, 0.0
    %v1088 = vsel %vm1024, 1.0, 0.0
    %v1089 = vsel %vm1025, 1.0, 0.0
    %v1090 = vsel %vm1026, 1.0, 0.0
    %v1091 = vsel %vm1027, 1.0, 0.0
    %v1092 = vsel %vm1028, 1.0, 0.0
    %v1093 = vsel %vm1029, 1.0, 0.0
    %v1094 = vsel %vm1030, 1.0, 0.0
    %v1095 = vsel %vm1031, 1.0, 0.0
    %v1096 = vsel %vm1032, 1.0, 0.0
    %v1097 = vsel %vm1033, 1.0, 0.0
    %v1098 = vsel %vm1034, 1.0, 0.0
    %v1099 = vsel %vm1035, 1.0, 0.0
    %v1100 = vsel %vm1036, 1.0, 0.0
    %v1101 = vsel %vm1037, 1.0, 0.0
    %v1102 = vsel %vm1038, 1.0, 0.0
    %v1103 = vsel %vm1039, 1.0, 0.0
    %v1104 = vsel %vm1040, 1.0, 0.0
    %v1105 = vsel %vm1041, 1.0, 0.0
    %v1106 = vsel %vm1042, 1.0, 0.0
    %v1107 = vsel %vm1043, 1.0, 0.0
    %v1108 = vsel %vm1044, 1.0, 0.0
    %v1109 = vsel %vm1045, 1.0, 0.0
    %v1110 = vsel %vm1046, 1.0, 0.0
    %v1111 = vsel %vm1047, 1.0, 0.0
    %v1112 = vsel %vm1048, 1.0, 0.0
    %v1113 = vsel %vm1049, 1.0, 0.0
    %v1114 = vsel %vm1050, 1.0, 0.0
    %v1115 = vsel %vm1051, 1.0, 0.0
    %v1116 = vsel %vm1052, 1.0, 0.0
    %v1117 = vsel %vm1053, 1.0, 0.0
    %v1118 = vsel %vm1054, 1.0, 0.0
    %v1119 = vpack.c.bf16 %v1056, %v1055
    %v1120 = vpack.c.bf16 %v1058, %v1057
    %v1121 = vpack.c.bf16 %v1060, %v1059
    %v1122 = vpack.c.bf16 %v1062, %v1061
    %v1123 = vpack.c.bf16 %v1064, %v1063
    %v1124 = vpack.c.bf16 %v1066, %v1065
    %v1125 = vpack.c.bf16 %v1068, %v1067
    %v1126 = vpack.c.bf16 %v1070, %v1069
    %v1127 = vpack.c.bf16 %v1072, %v1071
    %v1128 = vpack.c.bf16 %v1074, %v1073
    %v1129 = vpack.c.bf16 %v1076, %v1075
    %v1130 = vpack.c.bf16 %v1078, %v1077
    %v1131 = vpack.c.bf16 %v1080, %v1079
    %v1132 = vpack.c.bf16 %v1082, %v1081
    %v1133 = vpack.c.bf16 %v1084, %v1083
    %v1134 = vpack.c.bf16 %v1086, %v1085
    %v1135 = vpack.c.bf16 %v1088, %v1087
    %v1136 = vpack.c.bf16 %v1090, %v1089
    %v1137 = vpack.c.bf16 %v1092, %v1091
    %v1138 = vpack.c.bf16 %v1094, %v1093
    %v1139 = vpack.c.bf16 %v1096, %v1095
    %v1140 = vpack.c.bf16 %v1098, %v1097
    %v1141 = vpack.c.bf16 %v1100, %v1099
    %v1142 = vpack.c.bf16 %v1102, %v1101
    %v1143 = vpack.c.bf16 %v1104, %v1103
    %v1144 = vpack.c.bf16 %v1106, %v1105
    %v1145 = vpack.c.bf16 %v1108, %v1107
    %v1146 = vpack.c.bf16 %v1110, %v1109
    %v1147 = vpack.c.bf16 %v1112, %v1111
    %v1148 = vpack.c.bf16 %v1114, %v1113
    %v1149 = vpack.c.bf16 %v1116, %v1115
    %v1150 = vpack.c.bf16 %v1118, %v1117
    %v1183 = vunpack.c.l.b16 %v1119
    %v1184 = vunpack.c.h.b16 %v1119
    %v1185 = vunpack.c.l.b16 %v1120
    %v1186 = vunpack.c.h.b16 %v1120
    %v1187 = vunpack.c.l.b16 %v1121
    %v1188 = vunpack.c.h.b16 %v1121
    %v1189 = vunpack.c.l.b16 %v1122
    %v1190 = vunpack.c.h.b16 %v1122
    %v1191 = vunpack.c.l.b16 %v1123
    %v1192 = vunpack.c.h.b16 %v1123
    %v1193 = vunpack.c.l.b16 %v1124
    %v1194 = vunpack.c.h.b16 %v1124
    %v1195 = vunpack.c.l.b16 %v1125
    %v1196 = vunpack.c.h.b16 %v1125
    %v1197 = vunpack.c.l.b16 %v1126
    %v1198 = vunpack.c.h.b16 %v1126
    %v1199 = vunpack.c.l.b16 %v1127
    %v1200 = vunpack.c.h.b16 %v1127
    %v1201 = vunpack.c.l.b16 %v1128
    %v1202 = vunpack.c.h.b16 %v1128
    %v1203 = vunpack.c.l.b16 %v1129
    %v1204 = vunpack.c.h.b16 %v1129
    %v1205 = vunpack.c.l.b16 %v1130
    %v1206 = vunpack.c.h.b16 %v1130
    %v1207 = vunpack.c.l.b16 %v1131
    %v1208 = vunpack.c.h.b16 %v1131
    %v1209 = vunpack.c.l.b16 %v1132
    %v1210 = vunpack.c.h.b16 %v1132
    %v1211 = vunpack.c.l.b16 %v1133
    %v1212 = vunpack.c.h.b16 %v1133
    %v1213 = vunpack.c.l.b16 %v1134
    %v1214 = vunpack.c.h.b16 %v1134
    %v1215 = vunpack.c.l.b16 %v1135
    %v1216 = vunpack.c.h.b16 %v1135
    %v1217 = vunpack.c.l.b16 %v1136
    %v1218 = vunpack.c.h.b16 %v1136
    %v1219 = vunpack.c.l.b16 %v1137
    %v1220 = vunpack.c.h.b16 %v1137
    %v1221 = vunpack.c.l.b16 %v1138
    %v1222 = vunpack.c.h.b16 %v1138
    %v1223 = vunpack.c.l.b16 %v1139
    %v1224 = vunpack.c.h.b16 %v1139
    %v1225 = vunpack.c.l.b16 %v1140
    %v1226 = vunpack.c.h.b16 %v1140
    %v1227 = vunpack.c.l.b16 %v1141
    %v1228 = vunpack.c.h.b16 %v1141
    %v1229 = vunpack.c.l.b16 %v1142
    %v1230 = vunpack.c.h.b16 %v1142
    %v1231 = vunpack.c.l.b16 %v1143
    %v1232 = vunpack.c.h.b16 %v1143
    %v1233 = vunpack.c.l.b16 %v1144
    %v1234 = vunpack.c.h.b16 %v1144
    %v1235 = vunpack.c.l.b16 %v1145
    %v1236 = vunpack.c.h.b16 %v1145
    %v1237 = vunpack.c.l.b16 %v1146
    %v1238 = vunpack.c.h.b16 %v1146
    %v1239 = vunpack.c.l.b16 %v1147
    %v1240 = vunpack.c.h.b16 %v1147
    %v1241 = vunpack.c.l.b16 %v1148
    %v1242 = vunpack.c.h.b16 %v1148
    %v1243 = vunpack.c.l.b16 %v1149
    %v1244 = vunpack.c.h.b16 %v1149
    %v1245 = vunpack.c.l.b16 %v1150
    %v1246 = vunpack.c.h.b16 %v1150
    %v1247 = vpack.c.b16 %v1183, %v1183
    %v1248 = vpack.c.b16 %v1184, %v1184
    %v1249 = vpack.c.b16 %v1185, %v1185
    %v1250 = vpack.c.b16 %v1186, %v1186
    %v1251 = vpack.c.b16 %v1187, %v1187
    %v1252 = vpack.c.b16 %v1188, %v1188
    %v1253 = vpack.c.b16 %v1189, %v1189
    %v1254 = vpack.c.b16 %v1190, %v1190
    %v1255 = vpack.c.b16 %v1191, %v1191
    %v1256 = vpack.c.b16 %v1192, %v1192
    %v1257 = vpack.c.b16 %v1193, %v1193
    %v1258 = vpack.c.b16 %v1194, %v1194
    %v1259 = vpack.c.b16 %v1195, %v1195
    %v1260 = vpack.c.b16 %v1196, %v1196
    %v1261 = vpack.c.b16 %v1197, %v1197
    %v1262 = vpack.c.b16 %v1198, %v1198
    %v1263 = vpack.c.b16 %v1199, %v1199
    %v1264 = vpack.c.b16 %v1200, %v1200
    %v1265 = vpack.c.b16 %v1201, %v1201
    %v1266 = vpack.c.b16 %v1202, %v1202
    %v1267 = vpack.c.b16 %v1203, %v1203
    %v1268 = vpack.c.b16 %v1204, %v1204
    %v1269 = vpack.c.b16 %v1205, %v1205
    %v1270 = vpack.c.b16 %v1206, %v1206
    %v1271 = vpack.c.b16 %v1207, %v1207
    %v1272 = vpack.c.b16 %v1208, %v1208
    %v1273 = vpack.c.b16 %v1209, %v1209
    %v1274 = vpack.c.b16 %v1210, %v1210
    %v1275 = vpack.c.b16 %v1211, %v1211
    %v1276 = vpack.c.b16 %v1212, %v1212
    %v1277 = vpack.c.b16 %v1213, %v1213
    %v1278 = vpack.c.b16 %v1214, %v1214
    %v1279 = vpack.c.b16 %v1215, %v1215
    %v1280 = vpack.c.b16 %v1216, %v1216
    %v1281 = vpack.c.b16 %v1217, %v1217
    %v1282 = vpack.c.b16 %v1218, %v1218
    %v1283 = vpack.c.b16 %v1219, %v1219
    %v1284 = vpack.c.b16 %v1220, %v1220
    %v1285 = vpack.c.b16 %v1221, %v1221
    %v1286 = vpack.c.b16 %v1222, %v1222
    %v1287 = vpack.c.b16 %v1223, %v1223
    %v1288 = vpack.c.b16 %v1224, %v1224
    %v1289 = vpack.c.b16 %v1225, %v1225
    %v1290 = vpack.c.b16 %v1226, %v1226
    %v1291 = vpack.c.b16 %v1227, %v1227
    %v1292 = vpack.c.b16 %v1228, %v1228
    %v1293 = vpack.c.b16 %v1229, %v1229
    %v1294 = vpack.c.b16 %v1230, %v1230
    %v1295 = vpack.c.b16 %v1231, %v1231
    %v1296 = vpack.c.b16 %v1232, %v1232
    %v1297 = vpack.c.b16 %v1233, %v1233
    %v1298 = vpack.c.b16 %v1234, %v1234
    %v1299 = vpack.c.b16 %v1235, %v1235
    %v1300 = vpack.c.b16 %v1236, %v1236
    %v1301 = vpack.c.b16 %v1237, %v1237
    %v1302 = vpack.c.b16 %v1238, %v1238
    %v1303 = vpack.c.b16 %v1239, %v1239
    %v1304 = vpack.c.b16 %v1240, %v1240
    %v1305 = vpack.c.b16 %v1241, %v1241
    %v1306 = vpack.c.b16 %v1242, %v1242
    %v1307 = vpack.c.b16 %v1243, %v1243
    %v1308 = vpack.c.b16 %v1244, %v1244
    %v1309 = vpack.c.b16 %v1245, %v1245
    %v1310 = vpack.c.b16 %v1246, %v1246
    %1375 = vst [vmem:[#allocation8] sm:$0xf] %v1247
    %1376 = vst [vmem:[#allocation8 + $0x4] sm:$0xf] %v1248
    %1377 = vst [vmem:[#allocation8 + $0x8] sm:$0xf] %v1249
    %1378 = vst [vmem:[#allocation8 + $0xc] sm:$0xf] %v1250
    %1379 = vst [vmem:[#allocation8 + $0x10] sm:$0xf] %v1251
    %1380 = vst [vmem:[#allocation8 + $0x14] sm:$0xf] %v1252
    %1381 = vst [vmem:[#allocation8 + $0x18] sm:$0xf] %v1253
    %1382 = vst [vmem:[#allocation8 + $0x1c] sm:$0xf] %v1254
    %1383 = vst [vmem:[#allocation8 + $0x20] sm:$0xf] %v1255
    %1384 = vst [vmem:[#allocation8 + $0x24] sm:$0xf] %v1256
    %1385 = vst [vmem:[#allocation8 + $0x28] sm:$0xf] %v1257
    %1386 = vst [vmem:[#allocation8 + $0x2c] sm:$0xf] %v1258
    %1387 = vst [vmem:[#allocation8 + $0x30] sm:$0xf] %v1259
    %1388 = vst [vmem:[#allocation8 + $0x34] sm:$0xf] %v1260
    %1389 = vst [vmem:[#allocation8 + $0x38] sm:$0xf] %v1261
    %1390 = vst [vmem:[#allocation8 + $0x3c] sm:$0xf] %v1262
    %1391 = vst [vmem:[#allocation8 + $0x40] sm:$0xf] %v1263
    %1392 = vst [vmem:[#allocation8 + $0x44] sm:$0xf] %v1264
    %1393 = vst [vmem:[#allocation8 + $0x48] sm:$0xf] %v1265
    %1394 = vst [vmem:[#allocation8 + $0x4c] sm:$0xf] %v1266
    %1395 = vst [vmem:[#allocation8 + $0x50] sm:$0xf] %v1267
    %1396 = vst [vmem:[#allocation8 + $0x54] sm:$0xf] %v1268
    %1397 = vst [vmem:[#allocation8 + $0x58] sm:$0xf] %v1269
    %1398 = vst [vmem:[#allocation8 + $0x5c] sm:$0xf] %v1270
    %1399 = vst [vmem:[#allocation8 + $0x60] sm:$0xf] %v1271
    %1400 = vst [vmem:[#allocation8 + $0x64] sm:$0xf] %v1272
    %1401 = vst [vmem:[#allocation8 + $0x68] sm:$0xf] %v1273
    %1402 = vst [vmem:[#allocation8 + $0x6c] sm:$0xf] %v1274
    %1403 = vst [vmem:[#allocation8 + $0x70] sm:$0xf] %v1275
    %1404 = vst [vmem:[#allocation8 + $0x74] sm:$0xf] %v1276
    %1405 = vst [vmem:[#allocation8 + $0x78] sm:$0xf] %v1277
    %1406 = vst [vmem:[#allocation8 + $0x7c] sm:$0xf] %v1278
    %1407 = vst [vmem:[#allocation8 + $0x80] sm:$0xf] %v1279
    %1408 = vst [vmem:[#allocation8 + $0x84] sm:$0xf] %v1280
    %1409 = vst [vmem:[#allocation8 + $0x88] sm:$0xf] %v1281
    %1410 = vst [vmem:[#allocation8 + $0x8c] sm:$0xf] %v1282
    %1411 = vst [vmem:[#allocation8 + $0x90] sm:$0xf] %v1283
    %1412 = vst [vmem:[#allocation8 + $0x94] sm:$0xf] %v1284
    %1413 = vst [vmem:[#allocation8 + $0x98] sm:$0xf] %v1285
    %1414 = vst [vmem:[#allocation8 + $0x9c] sm:$0xf] %v1286
    %1415 = vst [vmem:[#allocation8 + $0xa0] sm:$0xf] %v1287
    %1416 = vst [vmem:[#allocation8 + $0xa4] sm:$0xf] %v1288
    %1417 = vst [vmem:[#allocation8 + $0xa8] sm:$0xf] %v1289
    %1418 = vst [vmem:[#allocation8 + $0xac] sm:$0xf] %v1290
    %1419 = vst [vmem:[#allocation8 + $0xb0] sm:$0xf] %v1291
    %1420 = vst [vmem:[#allocation8 + $0xb4] sm:$0xf] %v1292
    %1421 = vst [vmem:[#allocation8 + $0xb8] sm:$0xf] %v1293
    %1422 = vst [vmem:[#allocation8 + $0xbc] sm:$0xf] %v1294
    %1423 = vst [vmem:[#allocation8 + $0xc0] sm:$0xf] %v1295
    %1424 = vst [vmem:[#allocation8 + $0xc4] sm:$0xf] %v1296
    %1425 = vst [vmem:[#allocation8 + $0xc8] sm:$0xf] %v1297
    %1426 = vst [vmem:[#allocation8 + $0xcc] sm:$0xf] %v1298
    %1427 = vst [vmem:[#allocation8 + $0xd0] sm:$0xf] %v1299
    %1428 = vst [vmem:[#allocation8 + $0xd4] sm:$0xf] %v1300
    %1429 = vst [vmem:[#allocation8 + $0xd8] sm:$0xf] %v1301
    %1430 = vst [vmem:[#allocation8 + $0xdc] sm:$0xf] %v1302
    %1431 = vst [vmem:[#allocation8 + $0xe0] sm:$0xf] %v1303
    %1432 = vst [vmem:[#allocation8 + $0xe4] sm:$0xf] %v1304
    %1433 = vst [vmem:[#allocation8 + $0xe8] sm:$0xf] %v1305
    %1434 = vst [vmem:[#allocation8 + $0xec] sm:$0xf] %v1306
    %1435 = vst [vmem:[#allocation8 + $0xf0] sm:$0xf] %v1307
    %1436 = vst [vmem:[#allocation8 + $0xf4] sm:$0xf] %v1308
    %1437 = vst [vmem:[#allocation8 + $0xf8] sm:$0xf] %v1309
    %1438 = vst [vmem:[#allocation8 + $0xfc] sm:$0xf] %v1310
    // Predicated region
    $region26: #{tpu_custom_call.1} parent=1 // pred_check
      _
    $region27: #{tpu_custom_call.1} parent=1 // pred_check_branch
      %1440 = sbr.rel (0) target = $region29
    $region28: #{tpu_custom_call.1} parent=1 // pred_region
      %s1442 = ssub.s32 4096, 4096
      %1443 = vsyncadd [#allocation4], %s1442
      %s1444 = sshll.u32 [#allocation8], 4
      %s1445 = int_to_ptr.vmem [resolvable:$true] %s1444
      %1450 = dma.vmem_to_hbm [thread:$0]  %s1445, 4096, %s3, [#allocation4], 64, 64, 4
    $region29: #{tpu_custom_call.1} parent=1 // pred_fallthru
      _
    // Predicated region
    $region30: #{tpu_custom_call.1} parent=1 // pred_check
      _
    $region31: #{tpu_custom_call.1} parent=1 // pred_check_branch
      %1452 = sbr.rel (0) target = $region33
    $region32: #{tpu_custom_call.1} parent=1 // pred_region
      %1453 = dma.done [#allocation4], 4096
    $region33: #{tpu_custom_call.1} parent=1 // pred_fallthru
      _
    %1454 = vsyncpa [#allocation3], 1
    %1455 = vsyncpa [#allocation6], 1
    %1456 = vsyncpa [#allocation4], 1

</llo_original>
